<compile_context>
chip_gen: v7x
topology: tpu7x:2x2x1
jax: 0.10.0
libtpu: 0.0.40
codegen_flags: <defaults>
</compile_context>

<pallas_src>
import jax
import jax.numpy as jnp
from jax.experimental import pallas as pl
from jax.experimental.pallas import tpu as pltpu

# Feature cardinalities from torch_geometric's default x_map
# (atomic_num, chirality, degree, formal_charge, num_hs,
#  num_radical_electrons, hybridization, is_aromatic, is_in_ring)
ATOM_FEATURE_DIMS = [119, 9, 11, 12, 9, 5, 8, 2, 2]
NUM_FEATURES = len(ATOM_FEATURE_DIMS)

OFFSETS = [0]
for _d in ATOM_FEATURE_DIMS[:-1]:
    OFFSETS.append(OFFSETS[-1] + _d)          # [0,119,128,139,151,160,165,173,175]

V_TOTAL = sum(ATOM_FEATURE_DIMS)              # 177
LANE = 128
V_PAD = ((V_TOTAL + LANE - 1) // LANE) * LANE  # 256 (combined-vocab rows, padded)


def _round_up(x, m):
    return ((x + m - 1) // m) * m


def _make_selector_and_compare():
    """Constant selector S[9, 256] and compare row c[1, 256] (see header)."""
    sel = [[0.0] * V_PAD for _ in range(NUM_FEATURES)]
    cmp_row = [-1.0] * V_PAD                              # pad lanes never match
    for i, dim in enumerate(ATOM_FEATURE_DIMS):
        for l in range(OFFSETS[i], OFFSETS[i] + dim):
            sel[i][l] = 1.0
            cmp_row[l] = float(l - OFFSETS[i])
    return (jnp.array(sel, dtype=jnp.float32),
            jnp.array([cmp_row], dtype=jnp.float32))


def atom_encoder_kernel(idx_ref, sel_ref, cmp_ref, tbl_ref, out_ref):
    """idx_ref: [TN, 9]   int32 raw per-feature indices (no offsets applied)
       sel_ref: [9, 256]  f32 constant selector matrix
       cmp_ref: [1, 256]  f32 constant lane targets (-1 on padded lanes)
       tbl_ref: [256, D]  f32 combined embedding table (resident)
       out_ref: [TN, D]   f32 summed embeddings"""
    # Selector matmul: t[n, l] = idx[n, feature(l)] on valid lanes, 0 on pad lanes.
    idx_f = idx_ref[...].astype(jnp.float32)                               # [TN, 9]
    t = jnp.dot(idx_f, sel_ref[...], preferred_element_type=jnp.float32)   # [TN, 256]
    # One compare + one cast builds the 9-hot mask (vocab ranges are disjoint).
    mh = (t == cmp_ref[...]).astype(jnp.float32)                           # [TN, 256]
    # Single K=256 MXU matmul against the resident table sums all 9 embeddings.
    out_ref[...] = jnp.dot(mh, tbl_ref[...], preferred_element_type=jnp.float32)


def atom_encoder(x_idx, combined_table, *, tile_n=1024):
    """x_idx: [N, 9] int (raw per-feature indices); combined_table: [V_PAD, D] f32."""
    n, f = x_idx.shape
    assert f == NUM_FEATURES
    v_pad, d = combined_table.shape
    assert v_pad == V_PAD

    x_idx = x_idx.astype(jnp.int32)

    # Pad emb dim to a multiple of 128 so output stores are unmasked lane-dense.
    d_pad = _round_up(d, LANE)
    if d_pad != d:
        combined_table = jnp.pad(combined_table, ((0, 0), (0, d_pad - d)))

    # Row tile: multiple of 8, bounded by tile_n and by N (rounded to 8).
    n8 = _round_up(max(n, 8), 8)
    tn = max(8, (min(tile_n, n8) // 8) * 8)

    # VMEM budget: double-buffered idx (lane-padded to 128) + out blocks,
    # plus the resident table / constants.  Keep well under the smallest
    # scoped default (v7x: 32 MiB of 64 MiB physical).
    def _vmem_bytes(t):
        return (2 * t * LANE * 4          # idx block (stored as [t, 128] tiles)
                + 2 * t * d_pad * 4       # out block
                + 2 * V_PAD * d_pad * 4   # combined table
                + 2 * 24 * V_PAD * 4)     # selector + compare consts (generous)
    while tn > 8 and _vmem_bytes(tn) > 24 * 1024 * 1024:
        tn = max(8, (tn // 2 // 8) * 8)

    # Keep at least two row tiles when there is enough work, so the "parallel"
    # grid axis can feed both v7x TensorCores (no-op on v5e/v6e single-TC).
    if n8 // tn < 2 and n8 >= 16:
        tn = _round_up(pl.cdiv(n8, 2), 8)

    n_pad = _round_up(n, tn)
    if n_pad != n:
        # Padded rows get index 0 (a valid row); their outputs are sliced off.
        x_idx = jnp.pad(x_idx, ((0, n_pad - n), (0, 0)))

    sel, cmp_row = _make_selector_and_compare()

    out = pl.pallas_call(
        atom_encoder_kernel,
        out_shape=jax.ShapeDtypeStruct((n_pad, d_pad), jnp.float32),
        grid_spec=pltpu.PrefetchScalarGridSpec(
            num_scalar_prefetch=0,
            grid=(n_pad // tn,),
            in_specs=[
                pl.BlockSpec((tn, f), lambda i: (i, 0)),              # pipelined idx
                pl.BlockSpec((NUM_FEATURES, V_PAD), lambda i: (0, 0)),  # resident S
                pl.BlockSpec((1, V_PAD), lambda i: (0, 0)),           # resident c
                pl.BlockSpec((V_PAD, d_pad), lambda i: (0, 0)),       # resident table
            ],
            out_specs=pl.BlockSpec((tn, d_pad), lambda i: (i, 0)),    # pipelined out
        ),
        compiler_params=pltpu.CompilerParams(
            # Row tiles are independent -> megacore sharding on v7x.
            dimension_semantics=("parallel",),
        ),
        cost_estimate=pl.CostEstimate(
            flops=2 * n_pad * NUM_FEATURES * V_PAD + 2 * n_pad * V_PAD * d_pad,
            transcendentals=0,
            bytes_accessed=(n_pad * f * 4 + n_pad * d_pad * 4
                            + V_PAD * d_pad * 4 + (NUM_FEATURES + 1) * V_PAD * 4),
        ),
    )(x_idx, sel, cmp_row, combined_table)

    if n_pad != n or d_pad != d:
        out = out[:n, :d]
    return out


def make_params(emb_dim, key):
    """Xavier-uniform init for each embedding table (matches the torch module)."""
    tables = []
    for dim in ATOM_FEATURE_DIMS:
        key, sub = jax.random.split(key)
        bound = (6.0 / (dim + emb_dim)) ** 0.5          # xavier_uniform, gain=1
        tables.append(
            jax.random.uniform(sub, (dim, emb_dim), jnp.float32, -bound, bound)
        )
    combined = jnp.concatenate(tables, axis=0)                    # [V_TOTAL, D]
    combined = jnp.pad(combined, ((0, V_PAD - V_TOTAL), (0, 0)))  # [V_PAD, D]
    return combined, tables


def reference(x_idx, tables):
    out = 0
    for i, tbl in enumerate(tables):
        out = out + tbl[x_idx[:, i]]
    return out


if __name__ == "__main__":
    N = 500          # number of atoms / nodes (not a tile multiple -> tail path)
    EMB_DIM = 128    # lane-dense output

    key = jax.random.PRNGKey(0)
    k_tbl, k_idx = jax.random.split(key)

    combined_table, tables = make_params(EMB_DIM, k_tbl)

    # Random valid categorical indices per feature column.
    cols = []
    for dim in ATOM_FEATURE_DIMS:
        k_idx, sub = jax.random.split(k_idx)
        cols.append(jax.random.randint(sub, (N, 1), 0, dim, dtype=jnp.int32))
    x = jnp.concatenate(cols, axis=1)                             # [N, 9] int32

    out = atom_encoder(x, combined_table, tile_n=1024)            # -> grid=(2,)
    out = jax.block_until_ready(out)

    ref = reference(x, tables)
    assert out.shape == (N, EMB_DIM)
    assert jnp.allclose(out, ref, atol=1e-5, rtol=1e-5)

    print("KERNEL_OK")
</pallas_src>

<mosaic_0001>
module attributes {stable_mosaic.version = 11 : i64} {
  func.func @atom_encoder_kernel(%arg0: i32, %arg1: memref<256x9xi32, #tpu.memory_space<vmem>>, %arg2: memref<9x256xf32, #tpu.memory_space<vmem>>, %arg3: memref<1x256xf32, #tpu.memory_space<vmem>>, %arg4: memref<256x128xf32, #tpu.memory_space<vmem>>, %arg5: memref<256x128xf32, #tpu.memory_space<vmem>>) attributes {dimension_semantics = [#tpu.dimension_semantics<parallel>], iteration_bounds = array<i64: 2>, scalar_prefetch = 0 : i64, scratch_operands = 0 : i64, tpu.core_type = #tpu.core_type<tc>, window_params = [{transform_indices = @transform_0, window_bounds = array<i64: 256, 9>}, {pipeline_mode = #tpu.pipeline_mode<synchronous>, transform_indices = @transform_1, window_bounds = array<i64: 9, 256>}, {pipeline_mode = #tpu.pipeline_mode<synchronous>, transform_indices = @transform_2, window_bounds = array<i64: 1, 256>}, {pipeline_mode = #tpu.pipeline_mode<synchronous>, transform_indices = @transform_3, window_bounds = array<i64: 256, 128>}, {transform_indices = @transform_4, window_bounds = array<i64: 256, 128>}]} {
    %c0 = arith.constant 0 : index
    %c0_0 = arith.constant 0 : index
    %0 = vector.load %arg1[%c0, %c0_0] : memref<256x9xi32, #tpu.memory_space<vmem>>, vector<256x9xi32>
    %1 = arith.sitofp %0 : vector<256x9xi32> to vector<256x9xf32>
    %c0_1 = arith.constant 0 : index
    %c0_2 = arith.constant 0 : index
    %2 = vector.load %arg2[%c0_1, %c0_2] : memref<9x256xf32, #tpu.memory_space<vmem>>, vector<9x256xf32>
    %cst = arith.constant dense<0.000000e+00> : vector<256x256xf32>
    %3 = tpu.matmul %1, %2, %cst {dimension_numbers = #tpu.dot_dimension_numbers<[1], [0], [0], [1], [0, 0, 1, 1], [], []>} : vector<256x9xf32>, vector<9x256xf32>, vector<256x256xf32> -> vector<256x256xf32>
    %c0_3 = arith.constant 0 : index
    %c0_4 = arith.constant 0 : index
    %4 = vector.load %arg3[%c0_3, %c0_4] : memref<1x256xf32, #tpu.memory_space<vmem>>, vector<1x256xf32>
    %5 = vector.broadcast %4 : vector<1x256xf32> to vector<256x256xf32>
    %6 = arith.cmpf oeq, %3, %5 : vector<256x256xf32>
    %7 = arith.extui %6 : vector<256x256xi1> to vector<256x256xi32>
    %8 = arith.sitofp %7 : vector<256x256xi32> to vector<256x256xf32>
    %c0_5 = arith.constant 0 : index
    %c0_6 = arith.constant 0 : index
    %9 = vector.load %arg4[%c0_5, %c0_6] : memref<256x128xf32, #tpu.memory_space<vmem>>, vector<256x128xf32>
    %cst_7 = arith.constant dense<0.000000e+00> : vector<256x128xf32>
    %10 = tpu.matmul %8, %9, %cst_7 {dimension_numbers = #tpu.dot_dimension_numbers<[1], [0], [0], [1], [0, 0, 1, 1], [], []>} : vector<256x256xf32>, vector<256x128xf32>, vector<256x128xf32> -> vector<256x128xf32>
    %c0_8 = arith.constant 0 : index
    %c0_9 = arith.constant 0 : index
    %11 = vector.load %arg5[%c0_8, %c0_9] : memref<256x128xf32, #tpu.memory_space<vmem>>, vector<256x128xf32>
    tpu.vector_store %arg5[%c0_8, %c0_9], %10 {strides = array<i32>} : memref<256x128xf32, #tpu.memory_space<vmem>>, vector<256x128xf32>,
    return
  }
  func.func @transform_0(%arg0: i32) -> (i32, i32) {
    %c0_i32 = arith.constant 0 : i32
    %c0_i32_0 = arith.constant 0 : i32
    return %arg0, %c0_i32 : i32, i32
  }
  func.func @transform_1(%arg0: i32) -> (i32, i32) {
    %c0_i32 = arith.constant 0 : i32
    %c0_i32_0 = arith.constant 0 : i32
    %c0_i32_1 = arith.constant 0 : i32
    return %c0_i32, %c0_i32_0 : i32, i32
  }
  func.func @transform_2(%arg0: i32) -> (i32, i32) {
    %c0_i32 = arith.constant 0 : i32
    %c0_i32_0 = arith.constant 0 : i32
    %c0_i32_1 = arith.constant 0 : i32
    return %c0_i32, %c0_i32_0 : i32, i32
  }
  func.func @transform_3(%arg0: i32) -> (i32, i32) {
    %c0_i32 = arith.constant 0 : i32
    %c0_i32_0 = arith.constant 0 : i32
    %c0_i32_1 = arith.constant 0 : i32
    return %c0_i32, %c0_i32_0 : i32, i32
  }
  func.func @transform_4(%arg0: i32) -> (i32, i32) {
    %c0_i32 = arith.constant 0 : i32
    %c0_i32_0 = arith.constant 0 : i32
    return %arg0, %c0_i32 : i32, i32
  }
}

</mosaic_0001>

<llo_original>
// kernel: tpu_custom_call.1
$region0: #{tpu_custom_call.1}
  #allocation0 [shape = 'u32[]', space=smem, size = 0x4, offset = 0x4, fixed_abs, tag = 'smem constant byte address 0x4 - core index']
  #allocation1 [shape = 'u32[144,128]{1,0:T(1,128)}', space=vmem, size = 0x12000, scoped, tag = 'internal scratch']
  %s0 = inlined_call_operand.vmem [shape: s32[512,9], index: 0, kind: input, shape index: {}]
  %s1 = inlined_call_operand.vmem [shape: f32[9,256], index: 1, kind: input, shape index: {}]
  %s2 = inlined_call_operand.vmem [shape: f32[1,256], index: 2, kind: input, shape index: {}]
  %s3 = inlined_call_operand.vmem [shape: f32[256,128], index: 3, kind: input, shape index: {}]
  %s4 = inlined_call_operand.hbm [shape: f32[512,128], index: 4, kind: output, shape index: {}]
  %s5 = sld [smem:[#allocation0]]
  $region49: #{tpu_custom_call.1} parent=0
    _
  %s7 = ssub.s32 1, %s5
  %s8 = scalar_select 0, %s7, %s5
  $region1: #{tpu_custom_call.1} parent=0
    #allocation2 [shape = 'u8[262144]{0}', space=vmem, size = 0x40000, scoped, tag = 'output window, operand 0']
    #allocation3 [shape = 's32[2]{0}', space=sflag, size = 0x8, scoped, tag = 'scoped memory for tpu_custom_call.1']
    %9 = vsyncpa [#allocation3], 0
    %s10 = scalar_lea.sflag [#allocation3], 1
    %11 = vsyncpa %s10, 0
    loop: start=0, step=1, limit=4
    $region2: #{tpu_custom_call.1} parent=1 // loop_pre_header
      _
    $region3: #{tpu_custom_call.1} parent=1 // loop_header
      %s13 = sphi 0, %s17
      %p14 = scmp.ge.s32.totalorder %s13, 4
      %s23 = sphi 0, %s25
      %s26 = sphi 0, %s23
      %s27 = sphi 0, %s26
      %s43 = sphi 0, %s27
      %s47 = sphi 0, %s47
      %s49 = sphi 0, %s47
      %s50 = sphi 0, %s49
      %s64 = sphi 0, %s50
      %s68 = sphi 0, %s68
      %s70 = sphi 0, %s68
      %s71 = sphi 0, %s70
      %s85 = sphi 0, %s71
      %s89 = sphi 0, %s89
      %s91 = sphi 0, %s89
      %s92 = sphi 0, %s91
      %s106 = sphi 0, %s92
      %s112 = sphi 0, %s114
      %s115 = sphi 0, %s112
      %s116 = sphi 0, %s115
      %s132 = sphi 0, %s116
    $region4: #{tpu_custom_call.1} parent=1 // loop_header_branch
      %16 = sbr.rel (%p14) target = $region8
    $region5: #{tpu_custom_call.1} parent=1 // loop_body
      %s18 = ssub.s32 %s13, 1
      %s19 = ssub.s32 %s13, 2
      %s20 = sadd.s32 %s13, 1
      %s21 = ssub.s32 %s13, %s20
      %p22 = scmp.eq.s32.totalorder %s21, 0
      %s24 = sadd.s32 %s23, 1
      %s25 = scalar_select %p22, %s23, %s24
      %p28 = pneg %p22
      %p29 = scmp.eq.s32.totalorder %s13, 1
      %p30 = por %p28, %p29
      %p31 = scmp.ne.s32.totalorder %s23, %s26
      %p32 = scmp.eq.s32.totalorder %s13, 0
      %p33 = por %p31, %p32
      %p34 = scmp.ne.s32.totalorder %s23, %s26
      %p35 = scmp.eq.s32.totalorder %s18, 1
      %p36 = por %p34, %p35
      %p37 = scmp.ne.s32.totalorder %s26, %s27
      %p38 = scmp.eq.s32.totalorder %s18, 0
      %p39 = por %p37, %p38
      %p40 = scmp.ne.s32.totalorder %s26, %s27
      %p41 = scmp.eq.s32.totalorder %s19, 1
      %p42 = por %p40, %p41
      %p44 = scmp.ne.s32.totalorder %s27, %s43
      %p45 = scmp.eq.s32.totalorder %s19, 0
      %p46 = por %p44, %p45
      %s48 = sadd.s32 %s47, 1
      %p51 = scmp.eq.s32.totalorder %s13, 1
      %p52 = scmp.ne.s32.totalorder %s47, %s49
      %p53 = scmp.eq.s32.totalorder %s13, 0
      %p54 = por %p52, %p53
      %p55 = scmp.ne.s32.totalorder %s47, %s49
      %p56 = scmp.eq.s32.totalorder %s18, 1
      %p57 = por %p55, %p56
      %p58 = scmp.ne.s32.totalorder %s49, %s50
      %p59 = scmp.eq.s32.totalorder %s18, 0
      %p60 = por %p58, %p59
      %p61 = scmp.ne.s32.totalorder %s49, %s50
      %p62 = scmp.eq.s32.totalorder %s19, 1
      %p63 = por %p61, %p62
      %p65 = scmp.ne.s32.totalorder %s50, %s64
      %p66 = scmp.eq.s32.totalorder %s19, 0
      %p67 = por %p65, %p66
      %s69 = sadd.s32 %s68, 1
      %p72 = scmp.eq.s32.totalorder %s13, 1
      %p73 = scmp.ne.s32.totalorder %s68, %s70
      %p74 = scmp.eq.s32.totalorder %s13, 0
      %p75 = por %p73, %p74
      %p76 = scmp.ne.s32.totalorder %s68, %s70
      %p77 = scmp.eq.s32.totalorder %s18, 1
      %p78 = por %p76, %p77
      %p79 = scmp.ne.s32.totalorder %s70, %s71
      %p80 = scmp.eq.s32.totalorder %s18, 0
      %p81 = por %p79, %p80
      %p82 = scmp.ne.s32.totalorder %s70, %s71
      %p83 = scmp.eq.s32.totalorder %s19, 1
      %p84 = por %p82, %p83
      %p86 = scmp.ne.s32.totalorder %s71, %s85
      %p87 = scmp.eq.s32.totalorder %s19, 0
      %p88 = por %p86, %p87
      %s90 = sadd.s32 %s89, 1
      %p93 = scmp.eq.s32.totalorder %s13, 1
      %p94 = scmp.ne.s32.totalorder %s89, %s91
      %p95 = scmp.eq.s32.totalorder %s13, 0
      %p96 = por %p94, %p95
      %p97 = scmp.ne.s32.totalorder %s89, %s91
      %p98 = scmp.eq.s32.totalorder %s18, 1
      %p99 = por %p97, %p98
      %p100 = scmp.ne.s32.totalorder %s91, %s92
      %p101 = scmp.eq.s32.totalorder %s18, 0
      %p102 = por %p100, %p101
      %p103 = scmp.ne.s32.totalorder %s91, %s92
      %p104 = scmp.eq.s32.totalorder %s19, 1
      %p105 = por %p103, %p104
      %p107 = scmp.ne.s32.totalorder %s92, %s106
      %p108 = scmp.eq.s32.totalorder %s19, 0
      %p109 = por %p107, %p108
      %s110 = ssub.s32 %s13, %s20
      %p111 = scmp.eq.s32.totalorder %s110, 0
      %s113 = sadd.s32 %s112, 1
      %s114 = scalar_select %p111, %s112, %s113
      %p117 = pneg %p111
      %p118 = scmp.eq.s32.totalorder %s13, 1
      %p119 = por %p117, %p118
      %p120 = scmp.ne.s32.totalorder %s112, %s115
      %p121 = scmp.eq.s32.totalorder %s13, 0
      %p122 = por %p120, %p121
      %p123 = scmp.ne.s32.totalorder %s112, %s115
      %p124 = scmp.eq.s32.totalorder %s18, 1
      %p125 = por %p123, %p124
      %p126 = scmp.ne.s32.totalorder %s115, %s116
      %p127 = scmp.eq.s32.totalorder %s18, 0
      %p128 = por %p126, %p127
      %p129 = scmp.ne.s32.totalorder %s115, %s116
      %p130 = scmp.eq.s32.totalorder %s19, 1
      %p131 = por %p129, %p130
      %p133 = scmp.ne.s32.totalorder %s116, %s132
      %p134 = scmp.eq.s32.totalorder %s19, 0
      %p135 = por %p133, %p134
      %p136 = scmp.le.s32.totalorder 1, %s13
      %p137 = scmp.lt.s32.totalorder %s13, 3
      %p138 = pnand %p136, %p137
      %p139 = pneg %p138
      // Predicated region
      $region9: #{tpu_custom_call.1} parent=5 // pred_check
        _
      $region10: #{tpu_custom_call.1} parent=5 // pred_check_branch
        %141 = sbr.rel (%p138) target = $region12
      $region11: #{tpu_custom_call.1} parent=5 // pred_region
        %s142 = ssub.s32 %s13, 1
        // Predicated region
        $region13: #{tpu_custom_call.1} parent=11 // pred_check
          %p143 = pneg %p60
        $region14: #{tpu_custom_call.1} parent=11 // pred_check_branch
          %145 = sbr.rel (%p143) target = $region16
        $region15: #{tpu_custom_call.1} parent=11 // pred_region
          _
        $region16: #{tpu_custom_call.1} parent=11 // pred_fallthru
          _
        // Predicated region
        $region17: #{tpu_custom_call.1} parent=11 // pred_check
          %p146 = pneg %p81
        $region18: #{tpu_custom_call.1} parent=11 // pred_check_branch
          %148 = sbr.rel (%p146) target = $region20
        $region19: #{tpu_custom_call.1} parent=11 // pred_region
          _
        $region20: #{tpu_custom_call.1} parent=11 // pred_fallthru
          _
        // Predicated region
        $region21: #{tpu_custom_call.1} parent=11 // pred_check
          %p149 = pneg %p102
        $region22: #{tpu_custom_call.1} parent=11 // pred_check_branch
          %151 = sbr.rel (%p149) target = $region24
        $region23: #{tpu_custom_call.1} parent=11 // pred_region
          _
        $region24: #{tpu_custom_call.1} parent=11 // pred_fallthru
          _
      $region12: #{tpu_custom_call.1} parent=5 // pred_fallthru
        _
      %p152 = scmp.lt.s32.totalorder %s13, 2
      // Predicated region
      $region25: #{tpu_custom_call.1} parent=5 // pred_check
        %p153 = pneg %p152
      $region26: #{tpu_custom_call.1} parent=5 // pred_check_branch
        %155 = sbr.rel (%p153) target = $region28
      $region27: #{tpu_custom_call.1} parent=5 // pred_region
        // Predicated region
        $region29: #{tpu_custom_call.1} parent=27 // pred_check
          %p156 = pneg %p33
        $region30: #{tpu_custom_call.1} parent=27 // pred_check_branch
          %158 = sbr.rel (%p156) target = $region32
        $region31: #{tpu_custom_call.1} parent=27 // pred_region
          %s159 = smul.u32 32, %s13
          %p160 = scmp.lt.s32.totalorder %s159, 63
          %s161 = scalar_select %p160, %s159, 63
          %s162 = smul.addr %s161, 8
          %s163 = scalar_lea.vmem %s0, %s162
          %s164 = smul.u32 32, %s13
        $region32: #{tpu_custom_call.1} parent=27 // pred_fallthru
          _
      $region28: #{tpu_custom_call.1} parent=5 // pred_fallthru
        _
      %p165 = scmp.le.s32.totalorder 1, %s13
      %p166 = scmp.lt.s32.totalorder %s13, 3
      %p167 = pnand %p165, %p166
      %p168 = pneg %p167
      // Predicated region
      $region33: #{tpu_custom_call.1} parent=5 // pred_check
        _
      $region34: #{tpu_custom_call.1} parent=5 // pred_check_branch
        %170 = sbr.rel (%p167) target = $region36
      $region35: #{tpu_custom_call.1} parent=5 // pred_region
        %s171 = ssub.s32 %s13, 1
        %s172 = smul.u32 32, %s18
        %p173 = scmp.lt.s32.totalorder %s172, 63
        %s174 = scalar_select %p173, %s172, 63
        %s175 = smul.addr %s174, 8
        %s176 = scalar_lea.vmem %s0, %s175
        %p177 = pneg %p39
        %p178 = pneg %p36
        %p179 = pneg %p60
        %p180 = pneg %p57
        %p181 = pneg %p81
        %p182 = pneg %p78
        %p183 = pneg %p102
        %p184 = pneg %p99
        %p185 = pneg %p128
        %p186 = pneg %p125
        %s187 = sand.u32 %s115, 1
        %s188 = scalar_lea.sflag [#allocation3], %s187
        %s189 = sand.u32 %s115, 1
        %s190 = smul.addr %s189, 256
        %s191 = scalar_lea.vmem [#allocation2], %s190
        %s192 = smul.u32 32, %s18
        %p193 = scmp.lt.s32.totalorder %s192, 63
        %s194 = scalar_select %p193, %s192, 63
        %s195 = smul.addr %s194, 8
        %s196 = scalar_lea.vmem %s0, %s195
        %s197 = smul.u32 32, %s18
        %s198 = smul.u32 32, %s18
        %v199 = vld [vmem:[%s196] sm:$0xff]
        %v200 = vld [vmem:[%s196 + $0x8] sm:$0xff]
        %v201 = vld [vmem:[%s196 + $0x10] sm:$0xff]
        %v202 = vld [vmem:[%s196 + $0x18] sm:$0xff]
        %v203 = vld [vmem:[%s196 + $0x20] sm:$0xff]
        %v204 = vld [vmem:[%s196 + $0x28] sm:$0xff]
        %v205 = vld [vmem:[%s196 + $0x30] sm:$0xff]
        %v206 = vld [vmem:[%s196 + $0x38] sm:$0xff]
        %v207 = vld [vmem:[%s196 + $0x40] sm:$0xff]
        %v208 = vld [vmem:[%s196 + $0x48] sm:$0xff]
        %v209 = vld [vmem:[%s196 + $0x50] sm:$0xff]
        %v210 = vld [vmem:[%s196 + $0x58] sm:$0xff]
        %v211 = vld [vmem:[%s196 + $0x60] sm:$0xff]
        %v212 = vld [vmem:[%s196 + $0x68] sm:$0xff]
        %v213 = vld [vmem:[%s196 + $0x70] sm:$0xff]
        %v214 = vld [vmem:[%s196 + $0x78] sm:$0xff]
        %v215 = vld [vmem:[%s196 + $0x80] sm:$0xff]
        %v216 = vld [vmem:[%s196 + $0x88] sm:$0xff]
        %v217 = vld [vmem:[%s196 + $0x90] sm:$0xff]
        %v218 = vld [vmem:[%s196 + $0x98] sm:$0xff]
        %v219 = vld [vmem:[%s196 + $0xa0] sm:$0xff]
        %v220 = vld [vmem:[%s196 + $0xa8] sm:$0xff]
        %v221 = vld [vmem:[%s196 + $0xb0] sm:$0xff]
        %v222 = vld [vmem:[%s196 + $0xb8] sm:$0xff]
        %v223 = vld [vmem:[%s196 + $0xc0] sm:$0xff]
        %v224 = vld [vmem:[%s196 + $0xc8] sm:$0xff]
        %v225 = vld [vmem:[%s196 + $0xd0] sm:$0xff]
        %v226 = vld [vmem:[%s196 + $0xd8] sm:$0xff]
        %v227 = vld [vmem:[%s196 + $0xe0] sm:$0xff]
        %v228 = vld [vmem:[%s196 + $0xe8] sm:$0xff]
        %v229 = vld [vmem:[%s196 + $0xf0] sm:$0xff]
        %v230 = vld [vmem:[%s196 + $0xf8] sm:$0xff]
        %v231 = vcvt.s32.f32 %v199
        %v232 = vcvt.s32.f32 %v200
        %v233 = vcvt.s32.f32 %v201
        %v234 = vcvt.s32.f32 %v202
        %v235 = vcvt.s32.f32 %v203
        %v236 = vcvt.s32.f32 %v204
        %v237 = vcvt.s32.f32 %v205
        %v238 = vcvt.s32.f32 %v206
        %v239 = vcvt.s32.f32 %v207
        %v240 = vcvt.s32.f32 %v208
        %v241 = vcvt.s32.f32 %v209
        %v242 = vcvt.s32.f32 %v210
        %v243 = vcvt.s32.f32 %v211
        %v244 = vcvt.s32.f32 %v212
        %v245 = vcvt.s32.f32 %v213
        %v246 = vcvt.s32.f32 %v214
        %v247 = vcvt.s32.f32 %v215
        %v248 = vcvt.s32.f32 %v216
        %v249 = vcvt.s32.f32 %v217
        %v250 = vcvt.s32.f32 %v218
        %v251 = vcvt.s32.f32 %v219
        %v252 = vcvt.s32.f32 %v220
        %v253 = vcvt.s32.f32 %v221
        %v254 = vcvt.s32.f32 %v222
        %v255 = vcvt.s32.f32 %v223
        %v256 = vcvt.s32.f32 %v224
        %v257 = vcvt.s32.f32 %v225
        %v258 = vcvt.s32.f32 %v226
        %v259 = vcvt.s32.f32 %v227
        %v260 = vcvt.s32.f32 %v228
        %v261 = vcvt.s32.f32 %v229
        %v262 = vcvt.s32.f32 %v230
        %v263 = vld [vmem:[%s1] sm:$0xff]
        %v264 = vld [vmem:[%s1 + $0x8] sm:$0xff]
        %v265 = vld [vmem:[%s1 + $0x10] sm:$0x1]
        %v266 = vld [vmem:[%s1 + $0x18] sm:$0x1]
        %vm267 = vcmask 72704
        %v269 = vsel %vm267, %v231, 0
        %v272 = vsel %vm267, %v232, 0
        %v275 = vsel %vm267, %v233, 0
        %v278 = vsel %vm267, %v234, 0
        %v281 = vsel %vm267, %v235, 0
        %v284 = vsel %vm267, %v236, 0
        %v287 = vsel %vm267, %v237, 0
        %v290 = vsel %vm267, %v238, 0
        %v293 = vsel %vm267, %v239, 0
        %v296 = vsel %vm267, %v240, 0
        %v299 = vsel %vm267, %v241, 0
        %v302 = vsel %vm267, %v242, 0
        %v305 = vsel %vm267, %v243, 0
        %v308 = vsel %vm267, %v244, 0
        %v311 = vsel %vm267, %v245, 0
        %v314 = vsel %vm267, %v246, 0
        %v317 = vsel %vm267, %v247, 0
        %v320 = vsel %vm267, %v248, 0
        %v323 = vsel %vm267, %v249, 0
        %v326 = vsel %vm267, %v250, 0
        %v329 = vsel %vm267, %v251, 0
        %v332 = vsel %vm267, %v252, 0
        %v335 = vsel %vm267, %v253, 0
        %v338 = vsel %vm267, %v254, 0
        %v341 = vsel %vm267, %v255, 0
        %v344 = vsel %vm267, %v256, 0
        %v347 = vsel %vm267, %v257, 0
        %v350 = vsel %vm267, %v258, 0
        %v353 = vsel %vm267, %v259, 0
        %v356 = vsel %vm267, %v260, 0
        %v359 = vsel %vm267, %v261, 0
        %v362 = vsel %vm267, %v262, 0
        %vm364 = vcmask 1040384
        %v366 = vsel %vm364, %v265, 0
        %v369 = vsel %vm364, %v266, 0
        %371 = vmatprep.subr.mxu0 %v264
        %372 = vmatpush1.msra.mxu0 %v263
        %373 = vmatprep.subr.mxu0 %v369
        %374 = vmatpush1.msra.mxu0 %v366
        %375 = vmatprep.subr.mxu0 0.0
        %376 = vmatpush1.msra.mxu0 0.0
        %377 = vmatprep.subr.mxu0 0.0
        %378 = vmatpush1.msra.mxu0 0.0
        %379 = vmatprep.subr.mxu0 0.0
        %380 = vmatpush1.msra.mxu0 0.0
        %381 = vmatprep.subr.mxu0 0.0
        %382 = vmatpush1.msra.mxu0 0.0
        %383 = vmatprep.subr.mxu0 0.0
        %384 = vmatpush1.msra.mxu0 0.0
        %385 = vmatprep.subr.mxu0 0.0
        %386 = vmatpush1.msra.mxu0 0.0
        %387 = vmatprep.subr.mxu0 0.0
        %388 = vmatpush1.msra.mxu0 0.0
        %389 = vmatprep.subr.mxu0 0.0
        %390 = vmatpush1.msra.mxu0 0.0
        %391 = vmatprep.subr.mxu0 0.0
        %392 = vmatpush1.msra.mxu0 0.0
        %393 = vmatprep.subr.mxu0 0.0
        %394 = vmatpush1.msra.mxu0 0.0
        %395 = vmatprep.subr.mxu0 0.0
        %396 = vmatpush1.msra.mxu0 0.0
        %397 = vmatprep.subr.mxu0 0.0
        %398 = vmatpush1.msra.mxu0 0.0
        %399 = vmatprep.subr.mxu0 0.0
        %400 = vmatpush1.msra.mxu0 0.0
        %401 = vmatprep.subr.mxu0 0.0
        %402 = vmatpush1.msra.mxu0 0.0
        %403 = vmatprep.subr.mxu0 0.0
        %404 = vmatpush1.msra.mxu0 0.0
        %405 = vmatprep.subr.mxu0 0.0
        %406 = vmatpush1.msra.mxu0 0.0
        %407 = vmatprep.subr.mxu0 0.0
        %408 = vmatpush1.msra.mxu0 0.0
        %409 = vmatprep.subr.mxu0 0.0
        %410 = vmatpush1.msra.mxu0 0.0
        %411 = vmatprep.subr.mxu0 0.0
        %412 = vmatpush1.msra.mxu0 0.0
        %413 = vmatprep.subr.mxu0 0.0
        %414 = vmatpush1.msra.mxu0 0.0
        %415 = vmatprep.subr.mxu0 0.0
        %416 = vmatpush1.msra.mxu0 0.0
        %417 = vmatprep.subr.mxu0 0.0
        %418 = vmatpush1.msra.mxu0 0.0
        %419 = vmatprep.subr.mxu0 0.0
        %420 = vmatpush1.msra.mxu0 0.0
        %421 = vmatprep.subr.mxu0 0.0
        %422 = vmatpush1.msra.mxu0 0.0
        %423 = vmatprep.subr.mxu0 0.0
        %424 = vmatpush1.msra.mxu0 0.0
        %425 = vmatprep.subr.mxu0 0.0
        %426 = vmatpush1.msra.mxu0 0.0
        %427 = vmatprep.subr.mxu0 0.0
        %428 = vmatpush1.msra.mxu0 0.0
        %429 = vmatprep.subr.mxu0 0.0
        %430 = vmatpush1.msra.mxu0 0.0
        %431 = vmatprep.subr.mxu0 0.0
        %432 = vmatpush1.msra.mxu0 0.0
        %433 = vmatprep.subr.mxu0 0.0
        %434 = vmatpush1.msra.mxu0 0.0
        %435 = vmatprep.mubr.f32.mxu0 0.0
        %436 = vmatmul.mubr.f32.gmra.mrb[0].mxu0 %v269
        %v437 = vpop.f32.mrb[0].mxu0
        %v438 = vadd.f32 0.0, %v437
        %v439 = vpop.f32.mrb[0].mxu0
        %v440 = vadd.f32 0.0, %v439
        %441 = vmatprep.mubr.f32.mxu0 0.0
        %442 = vmatmul.mubr.f32.gmra.mrb[0].mxu0 %v272
        %v443 = vpop.f32.mrb[0].mxu0
        %v444 = vadd.f32 0.0, %v443
        %v445 = vpop.f32.mrb[0].mxu0
        %v446 = vadd.f32 0.0, %v445
        %447 = vmatprep.mubr.f32.mxu0 0.0
        %448 = vmatmul.mubr.f32.gmra.mrb[0].mxu0 %v275
        %v449 = vpop.f32.mrb[0].mxu0
        %v450 = vadd.f32 0.0, %v449
        %v451 = vpop.f32.mrb[0].mxu0
        %v452 = vadd.f32 0.0, %v451
        %453 = vmatprep.mubr.f32.mxu0 0.0
        %454 = vmatmul.mubr.f32.gmra.mrb[0].mxu0 %v278
        %v455 = vpop.f32.mrb[0].mxu0
        %v456 = vadd.f32 0.0, %v455
        %v457 = vpop.f32.mrb[0].mxu0
        %v458 = vadd.f32 0.0, %v457
        %459 = vmatprep.mubr.f32.mxu0 0.0
        %460 = vmatmul.mubr.f32.gmra.mrb[0].mxu0 %v281
        %v461 = vpop.f32.mrb[0].mxu0
        %v462 = vadd.f32 0.0, %v461
        %v463 = vpop.f32.mrb[0].mxu0
        %v464 = vadd.f32 0.0, %v463
        %465 = vmatprep.mubr.f32.mxu0 0.0
        %466 = vmatmul.mubr.f32.gmra.mrb[0].mxu0 %v284
        %v467 = vpop.f32.mrb[0].mxu0
        %v468 = vadd.f32 0.0, %v467
        %v469 = vpop.f32.mrb[0].mxu0
        %v470 = vadd.f32 0.0, %v469
        %471 = vmatprep.mubr.f32.mxu0 0.0
        %472 = vmatmul.mubr.f32.gmra.mrb[0].mxu0 %v287
        %v473 = vpop.f32.mrb[0].mxu0
        %v474 = vadd.f32 0.0, %v473
        %v475 = vpop.f32.mrb[0].mxu0
        %v476 = vadd.f32 0.0, %v475
        %477 = vmatprep.mubr.f32.mxu0 0.0
        %478 = vmatmul.mubr.f32.gmra.mrb[0].mxu0 %v290
        %v479 = vpop.f32.mrb[0].mxu0
        %v480 = vadd.f32 0.0, %v479
        %v481 = vpop.f32.mrb[0].mxu0
        %v482 = vadd.f32 0.0, %v481
        %483 = vmatprep.mubr.f32.mxu0 0.0
        %484 = vmatmul.mubr.f32.gmra.mrb[0].mxu0 %v293
        %v485 = vpop.f32.mrb[0].mxu0
        %v486 = vadd.f32 0.0, %v485
        %v487 = vpop.f32.mrb[0].mxu0
        %v488 = vadd.f32 0.0, %v487
        %489 = vmatprep.mubr.f32.mxu0 0.0
        %490 = vmatmul.mubr.f32.gmra.mrb[0].mxu0 %v296
        %v491 = vpop.f32.mrb[0].mxu0
        %v492 = vadd.f32 0.0, %v491
        %v493 = vpop.f32.mrb[0].mxu0
        %v494 = vadd.f32 0.0, %v493
        %495 = vmatprep.mubr.f32.mxu0 0.0
        %496 = vmatmul.mubr.f32.gmra.mrb[0].mxu0 %v299
        %v497 = vpop.f32.mrb[0].mxu0
        %v498 = vadd.f32 0.0, %v497
        %v499 = vpop.f32.mrb[0].mxu0
        %v500 = vadd.f32 0.0, %v499
        %501 = vmatprep.mubr.f32.mxu0 0.0
        %502 = vmatmul.mubr.f32.gmra.mrb[0].mxu0 %v302
        %v503 = vpop.f32.mrb[0].mxu0
        %v504 = vadd.f32 0.0, %v503
        %v505 = vpop.f32.mrb[0].mxu0
        %v506 = vadd.f32 0.0, %v505
        %507 = vmatprep.mubr.f32.mxu0 0.0
        %508 = vmatmul.mubr.f32.gmra.mrb[0].mxu0 %v305
        %v509 = vpop.f32.mrb[0].mxu0
        %v510 = vadd.f32 0.0, %v509
        %v511 = vpop.f32.mrb[0].mxu0
        %v512 = vadd.f32 0.0, %v511
        %513 = vmatprep.mubr.f32.mxu0 0.0
        %514 = vmatmul.mubr.f32.gmra.mrb[0].mxu0 %v308
        %v515 = vpop.f32.mrb[0].mxu0
        %v516 = vadd.f32 0.0, %v515
        %v517 = vpop.f32.mrb[0].mxu0
        %v518 = vadd.f32 0.0, %v517
        %519 = vmatprep.mubr.f32.mxu0 0.0
        %520 = vmatmul.mubr.f32.gmra.mrb[0].mxu0 %v311
        %v521 = vpop.f32.mrb[0].mxu0
        %v522 = vadd.f32 0.0, %v521
        %v523 = vpop.f32.mrb[0].mxu0
        %v524 = vadd.f32 0.0, %v523
        %525 = vmatprep.mubr.f32.mxu0 0.0
        %526 = vmatmul.mubr.f32.gmra.mrb[0].mxu0 %v314
        %v527 = vpop.f32.mrb[0].mxu0
        %v528 = vadd.f32 0.0, %v527
        %v529 = vpop.f32.mrb[0].mxu0
        %v530 = vadd.f32 0.0, %v529
        %531 = vmatprep.mubr.f32.mxu0 0.0
        %532 = vmatmul.mubr.f32.gmra.mrb[0].mxu0 %v317
        %v533 = vpop.f32.mrb[0].mxu0
        %v534 = vadd.f32 0.0, %v533
        %v535 = vpop.f32.mrb[0].mxu0
        %v536 = vadd.f32 0.0, %v535
        %537 = vmatprep.mubr.f32.mxu0 0.0
        %538 = vmatmul.mubr.f32.gmra.mrb[0].mxu0 %v320
        %v539 = vpop.f32.mrb[0].mxu0
        %v540 = vadd.f32 0.0, %v539
        %v541 = vpop.f32.mrb[0].mxu0
        %v542 = vadd.f32 0.0, %v541
        %543 = vmatprep.mubr.f32.mxu0 0.0
        %544 = vmatmul.mubr.f32.gmra.mrb[0].mxu0 %v323
        %v545 = vpop.f32.mrb[0].mxu0
        %v546 = vadd.f32 0.0, %v545
        %v547 = vpop.f32.mrb[0].mxu0
        %v548 = vadd.f32 0.0, %v547
        %549 = vmatprep.mubr.f32.mxu0 0.0
        %550 = vmatmul.mubr.f32.gmra.mrb[0].mxu0 %v326
        %v551 = vpop.f32.mrb[0].mxu0
        %v552 = vadd.f32 0.0, %v551
        %v553 = vpop.f32.mrb[0].mxu0
        %v554 = vadd.f32 0.0, %v553
        %555 = vmatprep.mubr.f32.mxu0 0.0
        %556 = vmatmul.mubr.f32.gmra.mrb[0].mxu0 %v329
        %v557 = vpop.f32.mrb[0].mxu0
        %v558 = vadd.f32 0.0, %v557
        %v559 = vpop.f32.mrb[0].mxu0
        %v560 = vadd.f32 0.0, %v559
        %561 = vmatprep.mubr.f32.mxu0 0.0
        %562 = vmatmul.mubr.f32.gmra.mrb[0].mxu0 %v332
        %v563 = vpop.f32.mrb[0].mxu0
        %v564 = vadd.f32 0.0, %v563
        %v565 = vpop.f32.mrb[0].mxu0
        %v566 = vadd.f32 0.0, %v565
        %567 = vmatprep.mubr.f32.mxu0 0.0
        %568 = vmatmul.mubr.f32.gmra.mrb[0].mxu0 %v335
        %v569 = vpop.f32.mrb[0].mxu0
        %v570 = vadd.f32 0.0, %v569
        %v571 = vpop.f32.mrb[0].mxu0
        %v572 = vadd.f32 0.0, %v571
        %573 = vmatprep.mubr.f32.mxu0 0.0
        %574 = vmatmul.mubr.f32.gmra.mrb[0].mxu0 %v338
        %v575 = vpop.f32.mrb[0].mxu0
        %v576 = vadd.f32 0.0, %v575
        %v577 = vpop.f32.mrb[0].mxu0
        %v578 = vadd.f32 0.0, %v577
        %579 = vmatprep.mubr.f32.mxu0 0.0
        %580 = vmatmul.mubr.f32.gmra.mrb[0].mxu0 %v341
        %v581 = vpop.f32.mrb[0].mxu0
        %v582 = vadd.f32 0.0, %v581
        %v583 = vpop.f32.mrb[0].mxu0
        %v584 = vadd.f32 0.0, %v583
        %585 = vmatprep.mubr.f32.mxu0 0.0
        %586 = vmatmul.mubr.f32.gmra.mrb[0].mxu0 %v344
        %v587 = vpop.f32.mrb[0].mxu0
        %v588 = vadd.f32 0.0, %v587
        %v589 = vpop.f32.mrb[0].mxu0
        %v590 = vadd.f32 0.0, %v589
        %591 = vmatprep.mubr.f32.mxu0 0.0
        %592 = vmatmul.mubr.f32.gmra.mrb[0].mxu0 %v347
        %v593 = vpop.f32.mrb[0].mxu0
        %v594 = vadd.f32 0.0, %v593
        %v595 = vpop.f32.mrb[0].mxu0
        %v596 = vadd.f32 0.0, %v595
        %597 = vmatprep.mubr.f32.mxu0 0.0
        %598 = vmatmul.mubr.f32.gmra.mrb[0].mxu0 %v350
        %v599 = vpop.f32.mrb[0].mxu0
        %v600 = vadd.f32 0.0, %v599
        %v601 = vpop.f32.mrb[0].mxu0
        %v602 = vadd.f32 0.0, %v601
        %603 = vmatprep.mubr.f32.mxu0 0.0
        %604 = vmatmul.mubr.f32.gmra.mrb[0].mxu0 %v353
        %v605 = vpop.f32.mrb[0].mxu0
        %v606 = vadd.f32 0.0, %v605
        %v607 = vpop.f32.mrb[0].mxu0
        %v608 = vadd.f32 0.0, %v607
        %609 = vmatprep.mubr.f32.mxu0 0.0
        %610 = vmatmul.mubr.f32.gmra.mrb[0].mxu0 %v356
        %v611 = vpop.f32.mrb[0].mxu0
        %v612 = vadd.f32 0.0, %v611
        %v613 = vpop.f32.mrb[0].mxu0
        %v614 = vadd.f32 0.0, %v613
        %615 = vmatprep.mubr.f32.mxu0 0.0
        %616 = vmatmul.mubr.f32.gmra.mrb[0].mxu0 %v359
        %v617 = vpop.f32.mrb[0].mxu0
        %v618 = vadd.f32 0.0, %v617
        %v619 = vpop.f32.mrb[0].mxu0
        %v620 = vadd.f32 0.0, %v619
        %621 = vmatprep.mubr.f32.mxu0 0.0
        %622 = vmatmul.mubr.f32.gmra.mrb[0].mxu0 %v362
        %v623 = vpop.f32.mrb[0].mxu0
        %v624 = vadd.f32 0.0, %v623
        %v625 = vpop.f32.mrb[0].mxu0
        %v626 = vadd.f32 0.0, %v625
        %627 = vdwg.mxu0
        %v628 = vld [vmem:[%s2] sm:$0x3]
        %v630 = vlaneseq
        %v631 = vshrl.u32 %v630, 7
        %v632 = vsub.s32 0, %v631
        %v633 = vrot.slane %v628, %v632
        %v634 = vlaneseq
        %v635 = vshrl.u32 %v634, 7
        %v636 = vsub.s32 1, %v635
        %v637 = vrot.slane %v628, %v636
        %vm640 = vcmp.eq.f32.partialorder %v438, %v633
        %vm641 = vcmp.eq.f32.partialorder %v440, %v637
        %vm642 = vcmp.eq.f32.partialorder %v444, %v633
        %vm643 = vcmp.eq.f32.partialorder %v446, %v637
        %vm644 = vcmp.eq.f32.partialorder %v450, %v633
        %vm645 = vcmp.eq.f32.partialorder %v452, %v637
        %vm646 = vcmp.eq.f32.partialorder %v456, %v633
        %vm647 = vcmp.eq.f32.partialorder %v458, %v637
        %vm648 = vcmp.eq.f32.partialorder %v462, %v633
        %vm649 = vcmp.eq.f32.partialorder %v464, %v637
        %vm650 = vcmp.eq.f32.partialorder %v468, %v633
        %vm651 = vcmp.eq.f32.partialorder %v470, %v637
        %vm652 = vcmp.eq.f32.partialorder %v474, %v633
        %vm653 = vcmp.eq.f32.partialorder %v476, %v637
        %vm654 = vcmp.eq.f32.partialorder %v480, %v633
        %vm655 = vcmp.eq.f32.partialorder %v482, %v637
        %vm656 = vcmp.eq.f32.partialorder %v486, %v633
        %vm657 = vcmp.eq.f32.partialorder %v488, %v637
        %vm658 = vcmp.eq.f32.partialorder %v492, %v633
        %vm659 = vcmp.eq.f32.partialorder %v494, %v637
        %vm660 = vcmp.eq.f32.partialorder %v498, %v633
        %vm661 = vcmp.eq.f32.partialorder %v500, %v637
        %vm662 = vcmp.eq.f32.partialorder %v504, %v633
        %vm663 = vcmp.eq.f32.partialorder %v506, %v637
        %vm664 = vcmp.eq.f32.partialorder %v510, %v633
        %vm665 = vcmp.eq.f32.partialorder %v512, %v637
        %vm666 = vcmp.eq.f32.partialorder %v516, %v633
        %vm667 = vcmp.eq.f32.partialorder %v518, %v637
        %vm668 = vcmp.eq.f32.partialorder %v522, %v633
        %vm669 = vcmp.eq.f32.partialorder %v524, %v637
        %vm670 = vcmp.eq.f32.partialorder %v528, %v633
        %vm671 = vcmp.eq.f32.partialorder %v530, %v637
        %vm672 = vcmp.eq.f32.partialorder %v534, %v633
        %vm673 = vcmp.eq.f32.partialorder %v536, %v637
        %vm674 = vcmp.eq.f32.partialorder %v540, %v633
        %vm675 = vcmp.eq.f32.partialorder %v542, %v637
        %vm676 = vcmp.eq.f32.partialorder %v546, %v633
        %vm677 = vcmp.eq.f32.partialorder %v548, %v637
        %vm678 = vcmp.eq.f32.partialorder %v552, %v633
        %vm679 = vcmp.eq.f32.partialorder %v554, %v637
        %vm680 = vcmp.eq.f32.partialorder %v558, %v633
        %vm681 = vcmp.eq.f32.partialorder %v560, %v637
        %vm682 = vcmp.eq.f32.partialorder %v564, %v633
        %vm683 = vcmp.eq.f32.partialorder %v566, %v637
        %vm684 = vcmp.eq.f32.partialorder %v570, %v633
        %vm685 = vcmp.eq.f32.partialorder %v572, %v637
        %vm686 = vcmp.eq.f32.partialorder %v576, %v633
        %vm687 = vcmp.eq.f32.partialorder %v578, %v637
        %vm688 = vcmp.eq.f32.partialorder %v582, %v633
        %vm689 = vcmp.eq.f32.partialorder %v584, %v637
        %vm690 = vcmp.eq.f32.partialorder %v588, %v633
        %vm691 = vcmp.eq.f32.partialorder %v590, %v637
        %vm692 = vcmp.eq.f32.partialorder %v594, %v633
        %vm693 = vcmp.eq.f32.partialorder %v596, %v637
        %vm694 = vcmp.eq.f32.partialorder %v600, %v633
        %vm695 = vcmp.eq.f32.partialorder %v602, %v637
        %vm696 = vcmp.eq.f32.partialorder %v606, %v633
        %vm697 = vcmp.eq.f32.partialorder %v608, %v637
        %vm698 = vcmp.eq.f32.partialorder %v612, %v633
        %vm699 = vcmp.eq.f32.partialorder %v614, %v637
        %vm700 = vcmp.eq.f32.partialorder %v618, %v633
        %vm701 = vcmp.eq.f32.partialorder %v620, %v637
        %vm702 = vcmp.eq.f32.partialorder %v624, %v633
        %vm703 = vcmp.eq.f32.partialorder %v626, %v637
        %v704 = vsel %vm640, 1, 0
        %v705 = vsel %vm641, 1, 0
        %v706 = vsel %vm642, 1, 0
        %v707 = vsel %vm643, 1, 0
        %v708 = vsel %vm644, 1, 0
        %v709 = vsel %vm645, 1, 0
        %v710 = vsel %vm646, 1, 0
        %v711 = vsel %vm647, 1, 0
        %v712 = vsel %vm648, 1, 0
        %v713 = vsel %vm649, 1, 0
        %v714 = vsel %vm650, 1, 0
        %v715 = vsel %vm651, 1, 0
        %v716 = vsel %vm652, 1, 0
        %v717 = vsel %vm653, 1, 0
        %v718 = vsel %vm654, 1, 0
        %v719 = vsel %vm655, 1, 0
        %v720 = vsel %vm656, 1, 0
        %v721 = vsel %vm657, 1, 0
        %v722 = vsel %vm658, 1, 0
        %v723 = vsel %vm659, 1, 0
        %v724 = vsel %vm660, 1, 0
        %v725 = vsel %vm661, 1, 0
        %v726 = vsel %vm662, 1, 0
        %v727 = vsel %vm663, 1, 0
        %v728 = vsel %vm664, 1, 0
        %v729 = vsel %vm665, 1, 0
        %v730 = vsel %vm666, 1, 0
        %v731 = vsel %vm667, 1, 0
        %v732 = vsel %vm668, 1, 0
        %v733 = vsel %vm669, 1, 0
        %v734 = vsel %vm670, 1, 0
        %v735 = vsel %vm671, 1, 0
        %v736 = vsel %vm672, 1, 0
        %v737 = vsel %vm673, 1, 0
        %v738 = vsel %vm674, 1, 0
        %v739 = vsel %vm675, 1, 0
        %v740 = vsel %vm676, 1, 0
        %v741 = vsel %vm677, 1, 0
        %v742 = vsel %vm678, 1, 0
        %v743 = vsel %vm679, 1, 0
        %v744 = vsel %vm680, 1, 0
        %v745 = vsel %vm681, 1, 0
        %v746 = vsel %vm682, 1, 0
        %v747 = vsel %vm683, 1, 0
        %v748 = vsel %vm684, 1, 0
        %v749 = vsel %vm685, 1, 0
        %v750 = vsel %vm686, 1, 0
        %v751 = vsel %vm687, 1, 0
        %v752 = vsel %vm688, 1, 0
        %v753 = vsel %vm689, 1, 0
        %v754 = vsel %vm690, 1, 0
        %v755 = vsel %vm691, 1, 0
        %v756 = vsel %vm692, 1, 0
        %v757 = vsel %vm693, 1, 0
        %v758 = vsel %vm694, 1, 0
        %v759 = vsel %vm695, 1, 0
        %v760 = vsel %vm696, 1, 0
        %v761 = vsel %vm697, 1, 0
        %v762 = vsel %vm698, 1, 0
        %v763 = vsel %vm699, 1, 0
        %v764 = vsel %vm700, 1, 0
        %v765 = vsel %vm701, 1, 0
        %v766 = vsel %vm702, 1, 0
        %v767 = vsel %vm703, 1, 0
        %v768 = vcvt.s32.f32 %v704
        %v769 = vcvt.s32.f32 %v705
        %v770 = vcvt.s32.f32 %v706
        %v771 = vcvt.s32.f32 %v707
        %v772 = vcvt.s32.f32 %v708
        %v773 = vcvt.s32.f32 %v709
        %v774 = vcvt.s32.f32 %v710
        %v775 = vcvt.s32.f32 %v711
        %v776 = vcvt.s32.f32 %v712
        %v777 = vcvt.s32.f32 %v713
        %v778 = vcvt.s32.f32 %v714
        %v779 = vcvt.s32.f32 %v715
        %v780 = vcvt.s32.f32 %v716
        %v781 = vcvt.s32.f32 %v717
        %v782 = vcvt.s32.f32 %v718
        %v783 = vcvt.s32.f32 %v719
        %v784 = vcvt.s32.f32 %v720
        %v785 = vcvt.s32.f32 %v721
        %v786 = vcvt.s32.f32 %v722
        %v787 = vcvt.s32.f32 %v723
        %v788 = vcvt.s32.f32 %v724
        %v789 = vcvt.s32.f32 %v725
        %v790 = vcvt.s32.f32 %v726
        %v791 = vcvt.s32.f32 %v727
        %v792 = vcvt.s32.f32 %v728
        %v793 = vcvt.s32.f32 %v729
        %v794 = vcvt.s32.f32 %v730
        %v795 = vcvt.s32.f32 %v731
        %v796 = vcvt.s32.f32 %v732
        %v797 = vcvt.s32.f32 %v733
        %v798 = vcvt.s32.f32 %v734
        %v799 = vcvt.s32.f32 %v735
        %v800 = vcvt.s32.f32 %v736
        %v801 = vcvt.s32.f32 %v737
        %v802 = vcvt.s32.f32 %v738
        %v803 = vcvt.s32.f32 %v739
        %v804 = vcvt.s32.f32 %v740
        %v805 = vcvt.s32.f32 %v741
        %v806 = vcvt.s32.f32 %v742
        %v807 = vcvt.s32.f32 %v743
        %v808 = vcvt.s32.f32 %v744
        %v809 = vcvt.s32.f32 %v745
        %v810 = vcvt.s32.f32 %v746
        %v811 = vcvt.s32.f32 %v747
        %v812 = vcvt.s32.f32 %v748
        %v813 = vcvt.s32.f32 %v749
        %v814 = vcvt.s32.f32 %v750
        %v815 = vcvt.s32.f32 %v751
        %v816 = vcvt.s32.f32 %v752
        %v817 = vcvt.s32.f32 %v753
        %v818 = vcvt.s32.f32 %v754
        %v819 = vcvt.s32.f32 %v755
        %v820 = vcvt.s32.f32 %v756
        %v821 = vcvt.s32.f32 %v757
        %v822 = vcvt.s32.f32 %v758
        %v823 = vcvt.s32.f32 %v759
        %v824 = vcvt.s32.f32 %v760
        %v825 = vcvt.s32.f32 %v761
        %v826 = vcvt.s32.f32 %v762
        %v827 = vcvt.s32.f32 %v763
        %v828 = vcvt.s32.f32 %v764
        %v829 = vcvt.s32.f32 %v765
        %v830 = vcvt.s32.f32 %v766
        %v831 = vcvt.s32.f32 %v767
        %v832 = vld [vmem:[%s3] sm:$0xff]
        %v833 = vld [vmem:[%s3 + $0x8] sm:$0xff]
        %v834 = vld [vmem:[%s3 + $0x10] sm:$0xff]
        %v835 = vld [vmem:[%s3 + $0x18] sm:$0xff]
        %v836 = vld [vmem:[%s3 + $0x20] sm:$0xff]
        %v837 = vld [vmem:[%s3 + $0x28] sm:$0xff]
        %v838 = vld [vmem:[%s3 + $0x30] sm:$0xff]
        %v839 = vld [vmem:[%s3 + $0x38] sm:$0xff]
        %v840 = vld [vmem:[%s3 + $0x40] sm:$0xff]
        %v841 = vld [vmem:[%s3 + $0x48] sm:$0xff]
        %v842 = vld [vmem:[%s3 + $0x50] sm:$0xff]
        %v843 = vld [vmem:[%s3 + $0x58] sm:$0xff]
        %v844 = vld [vmem:[%s3 + $0x60] sm:$0xff]
        %v845 = vld [vmem:[%s3 + $0x68] sm:$0xff]
        %v846 = vld [vmem:[%s3 + $0x70] sm:$0xff]
        %v847 = vld [vmem:[%s3 + $0x78] sm:$0xff]
        %v848 = vld [vmem:[%s3 + $0x80] sm:$0xff]
        %v849 = vld [vmem:[%s3 + $0x88] sm:$0xff]
        %v850 = vld [vmem:[%s3 + $0x90] sm:$0xff]
        %v851 = vld [vmem:[%s3 + $0x98] sm:$0xff]
        %v852 = vld [vmem:[%s3 + $0xa0] sm:$0xff]
        %v853 = vld [vmem:[%s3 + $0xa8] sm:$0xff]
        %v854 = vld [vmem:[%s3 + $0xb0] sm:$0xff]
        %v855 = vld [vmem:[%s3 + $0xb8] sm:$0xff]
        %v856 = vld [vmem:[%s3 + $0xc0] sm:$0xff]
        %v857 = vld [vmem:[%s3 + $0xc8] sm:$0xff]
        %v858 = vld [vmem:[%s3 + $0xd0] sm:$0xff]
        %v859 = vld [vmem:[%s3 + $0xd8] sm:$0xff]
        %v860 = vld [vmem:[%s3 + $0xe0] sm:$0xff]
        %v861 = vld [vmem:[%s3 + $0xe8] sm:$0xff]
        %v862 = vld [vmem:[%s3 + $0xf0] sm:$0xff]
        %v863 = vld [vmem:[%s3 + $0xf8] sm:$0xff]
        %864 = vmatprep.subr.mxu0 0.0
        %865 = vmatpush1.msra.mxu0 %v832
        %866 = vmatprep.subr.mxu0 0.0
        %867 = vmatpush1.msra.mxu0 %v833
        %868 = vmatprep.subr.mxu0 0.0
        %869 = vmatpush1.msra.mxu0 %v834
        %870 = vmatprep.subr.mxu0 0.0
        %871 = vmatpush1.msra.mxu0 %v835
        %872 = vmatprep.subr.mxu0 0.0
        %873 = vmatpush1.msra.mxu0 %v836
        %874 = vmatprep.subr.mxu0 0.0
        %875 = vmatpush1.msra.mxu0 %v837
        %876 = vmatprep.subr.mxu0 0.0
        %877 = vmatpush1.msra.mxu0 %v838
        %878 = vmatprep.subr.mxu0 0.0
        %879 = vmatpush1.msra.mxu0 %v839
        %880 = vmatprep.subr.mxu0 0.0
        %881 = vmatpush1.msra.mxu0 %v840
        %882 = vmatprep.subr.mxu0 0.0
        %883 = vmatpush1.msra.mxu0 %v841
        %884 = vmatprep.subr.mxu0 0.0
        %885 = vmatpush1.msra.mxu0 %v842
        %886 = vmatprep.subr.mxu0 0.0
        %887 = vmatpush1.msra.mxu0 %v843
        %888 = vmatprep.subr.mxu0 0.0
        %889 = vmatpush1.msra.mxu0 %v844
        %890 = vmatprep.subr.mxu0 0.0
        %891 = vmatpush1.msra.mxu0 %v845
        %892 = vmatprep.subr.mxu0 0.0
        %893 = vmatpush1.msra.mxu0 %v846
        %894 = vmatprep.subr.mxu0 0.0
        %895 = vmatpush1.msra.mxu0 %v847
        %896 = vmatprep.subr.mxu0 0.0
        %897 = vmatpush1.msra.mxu0 %v848
        %898 = vmatprep.subr.mxu0 0.0
        %899 = vmatpush1.msra.mxu0 %v849
        %900 = vmatprep.subr.mxu0 0.0
        %901 = vmatpush1.msra.mxu0 %v850
        %902 = vmatprep.subr.mxu0 0.0
        %903 = vmatpush1.msra.mxu0 %v851
        %904 = vmatprep.subr.mxu0 0.0
        %905 = vmatpush1.msra.mxu0 %v852
        %906 = vmatprep.subr.mxu0 0.0
        %907 = vmatpush1.msra.mxu0 %v853
        %908 = vmatprep.subr.mxu0 0.0
        %909 = vmatpush1.msra.mxu0 %v854
        %910 = vmatprep.subr.mxu0 0.0
        %911 = vmatpush1.msra.mxu0 %v855
        %912 = vmatprep.subr.mxu0 0.0
        %913 = vmatpush1.msra.mxu0 %v856
        %914 = vmatprep.subr.mxu0 0.0
        %915 = vmatpush1.msra.mxu0 %v857
        %916 = vmatprep.subr.mxu0 0.0
        %917 = vmatpush1.msra.mxu0 %v858
        %918 = vmatprep.subr.mxu0 0.0
        %919 = vmatpush1.msra.mxu0 %v859
        %920 = vmatprep.subr.mxu0 0.0
        %921 = vmatpush1.msra.mxu0 %v860
        %922 = vmatprep.subr.mxu0 0.0
        %923 = vmatpush1.msra.mxu0 %v861
        %924 = vmatprep.subr.mxu0 0.0
        %925 = vmatpush1.msra.mxu0 %v862
        %926 = vmatprep.subr.mxu0 0.0
        %927 = vmatpush1.msra.mxu0 %v863
        %928 = vmatprep.mubr.f32.mxu0 %v769
        %929 = vmatmul.mubr.f32.gmra.mrb[0].mxu0 %v768
        %v930 = vpop.f32.mrb[0].mxu0
        %v931 = vadd.f32 0.0, %v930
        %v932 = vpop.f32.mrb[0].mxu0
        %933 = vmatprep.mubr.f32.mxu0 %v771
        %934 = vmatmul.mubr.f32.gmra.mrb[0].mxu0 %v770
        %v935 = vpop.f32.mrb[0].mxu0
        %v936 = vadd.f32 0.0, %v935
        %v937 = vpop.f32.mrb[0].mxu0
        %938 = vmatprep.mubr.f32.mxu0 %v773
        %939 = vmatmul.mubr.f32.gmra.mrb[0].mxu0 %v772
        %v940 = vpop.f32.mrb[0].mxu0
        %v941 = vadd.f32 0.0, %v940
        %v942 = vpop.f32.mrb[0].mxu0
        %943 = vmatprep.mubr.f32.mxu0 %v775
        %944 = vmatmul.mubr.f32.gmra.mrb[0].mxu0 %v774
        %v945 = vpop.f32.mrb[0].mxu0
        %v946 = vadd.f32 0.0, %v945
        %v947 = vpop.f32.mrb[0].mxu0
        %948 = vmatprep.mubr.f32.mxu0 %v777
        %949 = vmatmul.mubr.f32.gmra.mrb[0].mxu0 %v776
        %v950 = vpop.f32.mrb[0].mxu0
        %v951 = vadd.f32 0.0, %v950
        %v952 = vpop.f32.mrb[0].mxu0
        %953 = vmatprep.mubr.f32.mxu0 %v779
        %954 = vmatmul.mubr.f32.gmra.mrb[0].mxu0 %v778
        %v955 = vpop.f32.mrb[0].mxu0
        %v956 = vadd.f32 0.0, %v955
        %v957 = vpop.f32.mrb[0].mxu0
        %958 = vmatprep.mubr.f32.mxu0 %v781
        %959 = vmatmul.mubr.f32.gmra.mrb[0].mxu0 %v780
        %v960 = vpop.f32.mrb[0].mxu0
        %v961 = vadd.f32 0.0, %v960
        %v962 = vpop.f32.mrb[0].mxu0
        %963 = vmatprep.mubr.f32.mxu0 %v783
        %964 = vmatmul.mubr.f32.gmra.mrb[0].mxu0 %v782
        %v965 = vpop.f32.mrb[0].mxu0
        %v966 = vadd.f32 0.0, %v965
        %v967 = vpop.f32.mrb[0].mxu0
        %968 = vmatprep.mubr.f32.mxu0 %v785
        %969 = vmatmul.mubr.f32.gmra.mrb[0].mxu0 %v784
        %v970 = vpop.f32.mrb[0].mxu0
        %v971 = vadd.f32 0.0, %v970
        %v972 = vpop.f32.mrb[0].mxu0
        %973 = vmatprep.mubr.f32.mxu0 %v787
        %974 = vmatmul.mubr.f32.gmra.mrb[0].mxu0 %v786
        %v975 = vpop.f32.mrb[0].mxu0
        %v976 = vadd.f32 0.0, %v975
        %v977 = vpop.f32.mrb[0].mxu0
        %978 = vmatprep.mubr.f32.mxu0 %v789
        %979 = vmatmul.mubr.f32.gmra.mrb[0].mxu0 %v788
        %v980 = vpop.f32.mrb[0].mxu0
        %v981 = vadd.f32 0.0, %v980
        %v982 = vpop.f32.mrb[0].mxu0
        %983 = vmatprep.mubr.f32.mxu0 %v791
        %984 = vmatmul.mubr.f32.gmra.mrb[0].mxu0 %v790
        %v985 = vpop.f32.mrb[0].mxu0
        %v986 = vadd.f32 0.0, %v985
        %v987 = vpop.f32.mrb[0].mxu0
        %988 = vmatprep.mubr.f32.mxu0 %v793
        %989 = vmatmul.mubr.f32.gmra.mrb[0].mxu0 %v792
        %v990 = vpop.f32.mrb[0].mxu0
        %v991 = vadd.f32 0.0, %v990
        %v992 = vpop.f32.mrb[0].mxu0
        %993 = vmatprep.mubr.f32.mxu0 %v795
        %994 = vmatmul.mubr.f32.gmra.mrb[0].mxu0 %v794
        %v995 = vpop.f32.mrb[0].mxu0
        %v996 = vadd.f32 0.0, %v995
        %v997 = vpop.f32.mrb[0].mxu0
        %998 = vmatprep.mubr.f32.mxu0 %v797
        %999 = vmatmul.mubr.f32.gmra.mrb[0].mxu0 %v796
        %v1000 = vpop.f32.mrb[0].mxu0
        %v1001 = vadd.f32 0.0, %v1000
        %v1002 = vpop.f32.mrb[0].mxu0
        %1003 = vmatprep.mubr.f32.mxu0 %v799
        %1004 = vmatmul.mubr.f32.gmra.mrb[0].mxu0 %v798
        %v1005 = vpop.f32.mrb[0].mxu0
        %v1006 = vadd.f32 0.0, %v1005
        %v1007 = vpop.f32.mrb[0].mxu0
        %1008 = vmatprep.mubr.f32.mxu0 %v801
        %1009 = vmatmul.mubr.f32.gmra.mrb[0].mxu0 %v800
        %v1010 = vpop.f32.mrb[0].mxu0
        %v1011 = vadd.f32 0.0, %v1010
        %v1012 = vpop.f32.mrb[0].mxu0
        %1013 = vmatprep.mubr.f32.mxu0 %v803
        %1014 = vmatmul.mubr.f32.gmra.mrb[0].mxu0 %v802
        %v1015 = vpop.f32.mrb[0].mxu0
        %v1016 = vadd.f32 0.0, %v1015
        %v1017 = vpop.f32.mrb[0].mxu0
        %1018 = vmatprep.mubr.f32.mxu0 %v805
        %1019 = vmatmul.mubr.f32.gmra.mrb[0].mxu0 %v804
        %v1020 = vpop.f32.mrb[0].mxu0
        %v1021 = vadd.f32 0.0, %v1020
        %v1022 = vpop.f32.mrb[0].mxu0
        %1023 = vmatprep.mubr.f32.mxu0 %v807
        %1024 = vmatmul.mubr.f32.gmra.mrb[0].mxu0 %v806
        %v1025 = vpop.f32.mrb[0].mxu0
        %v1026 = vadd.f32 0.0, %v1025
        %v1027 = vpop.f32.mrb[0].mxu0
        %1028 = vmatprep.mubr.f32.mxu0 %v809
        %1029 = vmatmul.mubr.f32.gmra.mrb[0].mxu0 %v808
        %v1030 = vpop.f32.mrb[0].mxu0
        %v1031 = vadd.f32 0.0, %v1030
        %v1032 = vpop.f32.mrb[0].mxu0
        %1033 = vmatprep.mubr.f32.mxu0 %v811
        %1034 = vmatmul.mubr.f32.gmra.mrb[0].mxu0 %v810
        %v1035 = vpop.f32.mrb[0].mxu0
        %v1036 = vadd.f32 0.0, %v1035
        %v1037 = vpop.f32.mrb[0].mxu0
        %1038 = vmatprep.mubr.f32.mxu0 %v813
        %1039 = vmatmul.mubr.f32.gmra.mrb[0].mxu0 %v812
        %v1040 = vpop.f32.mrb[0].mxu0
        %v1041 = vadd.f32 0.0, %v1040
        %v1042 = vpop.f32.mrb[0].mxu0
        %1043 = vmatprep.mubr.f32.mxu0 %v815
        %1044 = vmatmul.mubr.f32.gmra.mrb[0].mxu0 %v814
        %v1045 = vpop.f32.mrb[0].mxu0
        %v1046 = vadd.f32 0.0, %v1045
        %v1047 = vpop.f32.mrb[0].mxu0
        %1048 = vmatprep.mubr.f32.mxu0 %v817
        %1049 = vmatmul.mubr.f32.gmra.mrb[0].mxu0 %v816
        %v1050 = vpop.f32.mrb[0].mxu0
        %v1051 = vadd.f32 0.0, %v1050
        %v1052 = vpop.f32.mrb[0].mxu0
        %1053 = vmatprep.mubr.f32.mxu0 %v819
        %1054 = vmatmul.mubr.f32.gmra.mrb[0].mxu0 %v818
        %v1055 = vpop.f32.mrb[0].mxu0
        %v1056 = vadd.f32 0.0, %v1055
        %v1057 = vpop.f32.mrb[0].mxu0
        %1058 = vmatprep.mubr.f32.mxu0 %v821
        %1059 = vmatmul.mubr.f32.gmra.mrb[0].mxu0 %v820
        %v1060 = vpop.f32.mrb[0].mxu0
        %v1061 = vadd.f32 0.0, %v1060
        %v1062 = vpop.f32.mrb[0].mxu0
        %1063 = vmatprep.mubr.f32.mxu0 %v823
        %1064 = vmatmul.mubr.f32.gmra.mrb[0].mxu0 %v822
        %v1065 = vpop.f32.mrb[0].mxu0
        %v1066 = vadd.f32 0.0, %v1065
        %v1067 = vpop.f32.mrb[0].mxu0
        %1068 = vmatprep.mubr.f32.mxu0 %v825
        %1069 = vmatmul.mubr.f32.gmra.mrb[0].mxu0 %v824
        %v1070 = vpop.f32.mrb[0].mxu0
        %v1071 = vadd.f32 0.0, %v1070
        %v1072 = vpop.f32.mrb[0].mxu0
        %1073 = vmatprep.mubr.f32.mxu0 %v827
        %1074 = vmatmul.mubr.f32.gmra.mrb[0].mxu0 %v826
        %v1075 = vpop.f32.mrb[0].mxu0
        %v1076 = vadd.f32 0.0, %v1075
        %v1077 = vpop.f32.mrb[0].mxu0
        %1078 = vmatprep.mubr.f32.mxu0 %v829
        %1079 = vmatmul.mubr.f32.gmra.mrb[0].mxu0 %v828
        %v1080 = vpop.f32.mrb[0].mxu0
        %v1081 = vadd.f32 0.0, %v1080
        %v1082 = vpop.f32.mrb[0].mxu0
        %1083 = vmatprep.mubr.f32.mxu0 %v831
        %1084 = vmatmul.mubr.f32.gmra.mrb[0].mxu0 %v830
        %v1085 = vpop.f32.mrb[0].mxu0
        %v1086 = vadd.f32 0.0, %v1085
        %v1087 = vpop.f32.mrb[0].mxu0
        %1088 = vdwg.mxu0
        %1089 = vst [vmem:[%s191] sm:$0xff] %v931
        %1090 = vst [vmem:[%s191 + $0x8] sm:$0xff] %v936
        %1091 = vst [vmem:[%s191 + $0x10] sm:$0xff] %v941
        %1092 = vst [vmem:[%s191 + $0x18] sm:$0xff] %v946
        %1093 = vst [vmem:[%s191 + $0x20] sm:$0xff] %v951
        %1094 = vst [vmem:[%s191 + $0x28] sm:$0xff] %v956
        %1095 = vst [vmem:[%s191 + $0x30] sm:$0xff] %v961
        %1096 = vst [vmem:[%s191 + $0x38] sm:$0xff] %v966
        %1097 = vst [vmem:[%s191 + $0x40] sm:$0xff] %v971
        %1098 = vst [vmem:[%s191 + $0x48] sm:$0xff] %v976
        %1099 = vst [vmem:[%s191 + $0x50] sm:$0xff] %v981
        %1100 = vst [vmem:[%s191 + $0x58] sm:$0xff] %v986
        %1101 = vst [vmem:[%s191 + $0x60] sm:$0xff] %v991
        %1102 = vst [vmem:[%s191 + $0x68] sm:$0xff] %v996
        %1103 = vst [vmem:[%s191 + $0x70] sm:$0xff] %v1001
        %1104 = vst [vmem:[%s191 + $0x78] sm:$0xff] %v1006
        %1105 = vst [vmem:[%s191 + $0x80] sm:$0xff] %v1011
        %1106 = vst [vmem:[%s191 + $0x88] sm:$0xff] %v1016
        %1107 = vst [vmem:[%s191 + $0x90] sm:$0xff] %v1021
        %1108 = vst [vmem:[%s191 + $0x98] sm:$0xff] %v1026
        %1109 = vst [vmem:[%s191 + $0xa0] sm:$0xff] %v1031
        %1110 = vst [vmem:[%s191 + $0xa8] sm:$0xff] %v1036
        %1111 = vst [vmem:[%s191 + $0xb0] sm:$0xff] %v1041
        %1112 = vst [vmem:[%s191 + $0xb8] sm:$0xff] %v1046
        %1113 = vst [vmem:[%s191 + $0xc0] sm:$0xff] %v1051
        %1114 = vst [vmem:[%s191 + $0xc8] sm:$0xff] %v1056
        %1115 = vst [vmem:[%s191 + $0xd0] sm:$0xff] %v1061
        %1116 = vst [vmem:[%s191 + $0xd8] sm:$0xff] %v1066
        %1117 = vst [vmem:[%s191 + $0xe0] sm:$0xff] %v1071
        %1118 = vst [vmem:[%s191 + $0xe8] sm:$0xff] %v1076
        %1119 = vst [vmem:[%s191 + $0xf0] sm:$0xff] %v1081
        %1120 = vst [vmem:[%s191 + $0xf8] sm:$0xff] %v1086
        %s1121 = sand.u32 %s115, 1
        %s1122 = scalar_lea.sflag [#allocation3], %s1121
        %s1123 = sand.u32 %s115, 1
        %s1124 = smul.addr %s1123, 256
        %s1125 = scalar_lea.vmem [#allocation2], %s1124
        // Predicated region
        $region37: #{tpu_custom_call.1} parent=35 // pred_check
          %p1126 = pneg %p125
        $region38: #{tpu_custom_call.1} parent=35 // pred_check_branch
          %1128 = sbr.rel (%p1126) target = $region40
        $region39: #{tpu_custom_call.1} parent=35 // pred_region
          %s1129 = smul.u32 32, %s18
          %s1131 = ssub.s32 4096, 4096
          %1132 = vsyncadd %s1122, %s1131
          %s1133 = smul.addr %s1129, 128
          %s1134 = scalar_lea.hbm %s4, %s1133
          %s1135 = sshll.u32 %s1125, 4
          %s1136 = int_to_ptr.vmem [resolvable:$true] %s1135
          %1141 = dma.vmem_to_hbm [thread:$0]  %s1136, 4096, %s1134, %s1122, 128, 128, 8
        $region40: #{tpu_custom_call.1} parent=35 // pred_fallthru
          _
      $region36: #{tpu_custom_call.1} parent=5 // pred_fallthru
        _
      %p1142 = scmp.le.s32.totalorder 2, %s13
      // Predicated region
      $region41: #{tpu_custom_call.1} parent=5 // pred_check
        %p1143 = pneg %p1142
      $region42: #{tpu_custom_call.1} parent=5 // pred_check_branch
        %1145 = sbr.rel (%p1143) target = $region44
      $region43: #{tpu_custom_call.1} parent=5 // pred_region
        %s1146 = ssub.s32 %s13, 2
        // Predicated region
        $region45: #{tpu_custom_call.1} parent=43 // pred_check
          %p1147 = pneg %p131
        $region46: #{tpu_custom_call.1} parent=43 // pred_check_branch
          %1149 = sbr.rel (%p1147) target = $region48
        $region47: #{tpu_custom_call.1} parent=43 // pred_region
          %s1150 = sand.u32 %s116, 1
          %s1151 = scalar_lea.sflag [#allocation3], %s1150
          %s1152 = sand.u32 %s116, 1
          %s1153 = smul.addr %s1152, 256
          %s1154 = scalar_lea.vmem [#allocation2], %s1153
          %1155 = dma.done %s1151, 4096
        $region48: #{tpu_custom_call.1} parent=43 // pred_fallthru
          _
      $region44: #{tpu_custom_call.1} parent=5 // pred_fallthru
        _
    $region6: #{tpu_custom_call.1} parent=1 // loop_footer
      %s17 = sadd.s32 1, %s13
    $region7: #{tpu_custom_call.1} parent=1 // loop_footer_branch
      %12 = sbr.rel target = $region3
    $region8: #{tpu_custom_call.1} parent=1 // loop_exit
      _
    %1156 = vsyncpa [#allocation3], 1
    %s1157 = scalar_lea.sflag [#allocation3], 1
    %1158 = vsyncpa %s1157, 1

</llo_original>
